<compile_context>
chip_gen: v5e
topology: v5e:2x2
jax: 0.10.0
libtpu: 0.0.40
codegen_flags: <defaults>
</compile_context>

<pallas_src>
import jax
import jax.numpy as jnp
from jax.experimental import pallas as pl
from jax.experimental.pallas import tpu as pltpu

_LANE = 128
_SUBLANE = 8


def _round_up(x, m):
    return (x + m - 1) // m * m


# ----------------------------------------------------------------------------
# Pallas kernel: fused   logits = x @ W + b   and   probs = sigmoid(logits)
# One grid step handles a (TM, K) slab of the batch; W/b are VMEM-resident.
# ----------------------------------------------------------------------------
def bernoulli_head_kernel(x_ref, w_ref, b_ref, logits_ref, probs_ref):
    logits = jnp.dot(x_ref[...], w_ref[...], preferred_element_type=jnp.float32)
    logits = logits + b_ref[...]                      # (1, N) bias, resident in VMEM
    logits_ref[...] = logits.astype(logits_ref.dtype)
    # sigmoid(z) == 0.5 * (tanh(z/2) + 1): one EUP push instead of exp + divide.
    probs_ref[...] = (0.5 * (jnp.tanh(0.5 * logits) + 1.0)).astype(probs_ref.dtype)


# ----------------------------------------------------------------------------
# VMEM budgeting / tile selection
# ----------------------------------------------------------------------------
def _vmem_budget_bytes():
    cap = 64 << 20  # conservative fallback (v7x physical VMEM per TC)
    try:
        info = pltpu.get_tpu_info()
        cap = int(getattr(info, "vmem_capacity_bytes", cap))
    except Exception:
        pass
    # ~96 MiB on 128 MiB parts (v5e/v6e), ~40 MiB on 64 MiB parts (v7x):
    # leaves headroom for compiler internal scratch + layout padding slop.
    budget = min(3 * cap // 4, cap - (24 << 20))
    return max(budget, 16 << 20)


def _tile_vmem_bytes(tm, K, N, x_bytes, w_bytes, out_bytes):
    """(8,128)-tiled-layout-aware VMEM estimate for one pipelined tile set."""
    lane_n = _round_up(N, _LANE)
    lane_k = _round_up(K, _LANE)
    sub_k = _round_up(K, _SUBLANE)
    x_blk = 2 * tm * lane_k * x_bytes            # double-buffered activations
    w_blk = 2 * sub_k * lane_n * w_bytes         # assume DB despite constant index_map
    b_blk = 2 * _SUBLANE * lane_n * 4
    o_blk = 2 * 2 * tm * lane_n * out_bytes      # two outputs, double-buffered
    return x_blk + w_blk + b_blk + o_blk


def _choose_tm(B, K, N, x_bytes, w_bytes, out_bytes, budget):
    b8 = _round_up(B, _SUBLANE)
    # Prefer >= 2 grid steps so both v7x TensorCores get work (harmless on v5e/v6e).
    cap = b8 if b8 < 2 * _SUBLANE else _round_up(b8 // 2, _SUBLANE)
    for tm in (1024, 512, 256, 128, 64, 32, 16, 8):
        if tm > cap:
            continue
        if _tile_vmem_bytes(tm, K, N, x_bytes, w_bytes, out_bytes) > budget:
            continue
        b_pad = _round_up(b8, tm)
        # Cap batch-padding waste at ~12.5% (never matmul/writeback 2x padding rows).
        if b_pad - b8 > max(b8 // 8, _SUBLANE):
            continue
        return tm
    return _SUBLANE


# ----------------------------------------------------------------------------
# Wrapper
# ----------------------------------------------------------------------------
def bernoulli_head_pallas(x, w, b, *, logits_dtype=jnp.float32,
                          probs_dtype=jnp.float32, compute_dtype=None):
    """x: (B, K), w: (K, N), b: (N,) -> (logits, probs), each (B, N).

    compute_dtype=jnp.bfloat16 halves the x/W input streams (MXU-friendly);
    bf16 logits/probs dtypes halve the dominant HBM writeback.  Defaults are
    f32 to preserve the PyTorch forward semantics exactly.
    """
    B, K = x.shape
    Kw, N = w.shape
    assert Kw == K and b.shape == (N,)

    cdt = jnp.dtype(compute_dtype) if compute_dtype is not None else jnp.dtype(x.dtype)
    out_bytes = max(jnp.dtype(logits_dtype).itemsize, jnp.dtype(probs_dtype).itemsize)

    budget = _vmem_budget_bytes()
    tm = _choose_tm(B, K, N, cdt.itemsize, cdt.itemsize, out_bytes, budget)
    b_pad = _round_up(max(B, tm), tm)

    x_c = x.astype(cdt)
    w_c = w.astype(cdt)
    if b_pad != B:  # skip the pad pass when the batch is already tile-aligned
        x_c = jnp.pad(x_c, ((0, b_pad - B), (0, 0)))
    b2 = b.astype(jnp.float32).reshape(1, N)

    grid = (b_pad // tm,)

    logits, probs = pl.pallas_call(
        bernoulli_head_kernel,
        out_shape=(
            jax.ShapeDtypeStruct((b_pad, N), logits_dtype),
            jax.ShapeDtypeStruct((b_pad, N), probs_dtype),
        ),
        grid=grid,
        in_specs=[
            pl.BlockSpec((tm, K), lambda i: (i, 0)),   # batch-tiled activations
            pl.BlockSpec((K, N), lambda i: (0, 0)),    # resident weight (full extent)
            pl.BlockSpec((1, N), lambda i: (0, 0)),    # resident bias
        ],
        out_specs=(
            pl.BlockSpec((tm, N), lambda i: (i, 0)),   # full-extent N: no lane padding
            pl.BlockSpec((tm, N), lambda i: (i, 0)),
        ),
        compiler_params=pltpu.CompilerParams(
            dimension_semantics=("parallel",),
            vmem_limit_bytes=int(budget),
        ),
    )(x_c, w_c, b2)

    if b_pad != B:  # only slice when padding was actually added
        logits = logits[:B]
        probs = probs[:B]
    return logits, probs


# ----------------------------------------------------------------------------
# FixedBernoulli distribution (plain-JAX glue, same semantics as PyTorch class)
# ----------------------------------------------------------------------------
class FixedBernoulli:
    def __init__(self, logits, probs):
        self.logits = logits
        self.probs = probs

    def log_prob(self, actions):
        z = self.logits.astype(jnp.float32)
        lp = actions * jax.nn.log_sigmoid(z) + (1.0 - actions) * jax.nn.log_sigmoid(-z)
        return lp.reshape(actions.shape[0], -1).sum(axis=-1, keepdims=True)

    def entropy(self):
        z = self.logits.astype(jnp.float32)
        p = self.probs.astype(jnp.float32)
        return (jax.nn.softplus(z) - p * z).sum(axis=-1)

    def mode(self):
        return (self.probs > 0.5).astype(jnp.float32)


class BernoulliHead:
    """JAX/Pallas equivalent of the PyTorch BernoulliHead module."""

    def __init__(self, num_inputs, num_outputs, key):
        # orthogonal_ (gain=1) on the (out, in) weight, zero bias — same as init_.
        w_pt = jax.nn.initializers.orthogonal(scale=1.0)(
            key, (num_outputs, num_inputs), jnp.float32
        )
        self.w = jnp.transpose(w_pt)              # (num_inputs, num_outputs)
        self.b = jnp.zeros((num_outputs,), jnp.float32)

    def __call__(self, x, *, fast=False):
        # fast=True trades exact f32 parity for ~2x less HBM traffic
        # (bf16 operands + bf16 outputs) on this writeback-bound op.
        if fast:
            logits, probs = bernoulli_head_pallas(
                x, self.w, self.b,
                logits_dtype=jnp.bfloat16, probs_dtype=jnp.bfloat16,
                compute_dtype=jnp.bfloat16)
        else:
            logits, probs = bernoulli_head_pallas(x, self.w, self.b)
        return FixedBernoulli(logits, probs)


if __name__ == "__main__":
    key = jax.random.PRNGKey(0)
    k_x, k_w = jax.random.split(key)

    batch, num_inputs, num_outputs = 8, 32, 16
    x = jax.random.normal(k_x, (batch, num_inputs), jnp.float32)

    head = BernoulliHead(num_inputs, num_outputs, k_w)

    # --- default (f32, exact-parity) path -----------------------------------
    dist = head(x)
    actions = (jax.random.uniform(k_x, (batch, num_outputs)) > 0.5).astype(jnp.float32)
    lp = dist.log_prob(actions)
    ent = dist.entropy()
    mode = dist.mode()
    jax.block_until_ready((dist.logits, dist.probs, lp, ent, mode))

    ref_logits = x @ head.w + head.b
    ref_probs = jax.nn.sigmoid(ref_logits)
    assert dist.logits.shape == (batch, num_outputs)
    assert dist.probs.shape == (batch, num_outputs)
    assert jnp.allclose(dist.logits, ref_logits, atol=1e-5, rtol=1e-5)
    assert jnp.allclose(dist.probs, ref_probs, atol=1e-5, rtol=1e-5)
    assert lp.shape == (batch, 1)
    assert ent.shape == (batch,)
    assert mode.shape == (batch, num_outputs)

    # --- ragged batch (exercises capped batch padding + output slice) -------
    x11 = jax.random.normal(k_x, (11, num_inputs), jnp.float32)
    l11, p11 = bernoulli_head_pallas(x11, head.w, head.b)
    jax.block_until_ready((l11, p11))
    ref11 = x11 @ head.w + head.b
    assert l11.shape == (11, num_outputs) and p11.shape == (11, num_outputs)
    assert jnp.allclose(l11, ref11, atol=1e-5, rtol=1e-5)
    assert jnp.allclose(p11, jax.nn.sigmoid(ref11), atol=1e-5, rtol=1e-5)

    # --- bf16 fast path (bandwidth-optimized) --------------------------------
    dist_f = head(x, fast=True)
    jax.block_until_ready((dist_f.logits, dist_f.probs))
    assert jnp.allclose(dist_f.logits.astype(jnp.float32), ref_logits,
                        atol=5e-2, rtol=5e-2)
    assert jnp.allclose(dist_f.probs.astype(jnp.float32), ref_probs,
                        atol=2e-2, rtol=2e-2)

    print("KERNEL_OK")
</pallas_src>

<mosaic_0001>
module attributes {stable_mosaic.version = 11 : i64} {
  func.func @bernoulli_head_kernel(%arg0: i32, %arg1: memref<8x32xf32, #tpu.memory_space<vmem>>, %arg2: memref<32x16xf32, #tpu.memory_space<vmem>>, %arg3: memref<1x16xf32, #tpu.memory_space<vmem>>, %arg4: memref<8x16xf32, #tpu.memory_space<vmem>>, %arg5: memref<8x16xf32, #tpu.memory_space<vmem>>) attributes {dimension_semantics = [#tpu.dimension_semantics<parallel>], iteration_bounds = array<i64: 1>, scalar_prefetch = 0 : i64, scratch_operands = 0 : i64, tpu.core_type = #tpu.core_type<tc>, window_params = [{transform_indices = @transform_0, window_bounds = array<i64: 8, 32>}, {pipeline_mode = #tpu.pipeline_mode<synchronous>, transform_indices = @transform_1, window_bounds = array<i64: 32, 16>}, {pipeline_mode = #tpu.pipeline_mode<synchronous>, transform_indices = @transform_2, window_bounds = array<i64: 1, 16>}, {transform_indices = @transform_3, window_bounds = array<i64: 8, 16>}, {transform_indices = @transform_4, window_bounds = array<i64: 8, 16>}]} {
    %c0 = arith.constant 0 : index
    %c0_0 = arith.constant 0 : index
    %0 = vector.load %arg1[%c0, %c0_0] : memref<8x32xf32, #tpu.memory_space<vmem>>, vector<8x32xf32>
    %c0_1 = arith.constant 0 : index
    %c0_2 = arith.constant 0 : index
    %1 = vector.load %arg2[%c0_1, %c0_2] : memref<32x16xf32, #tpu.memory_space<vmem>>, vector<32x16xf32>
    %cst = arith.constant dense<0.000000e+00> : vector<8x16xf32>
    %2 = tpu.matmul %0, %1, %cst {dimension_numbers = #tpu.dot_dimension_numbers<[1], [0], [0], [1], [0, 0, 1, 1], [], []>} : vector<8x32xf32>, vector<32x16xf32>, vector<8x16xf32> -> vector<8x16xf32>
    %c0_3 = arith.constant 0 : index
    %c0_4 = arith.constant 0 : index
    %3 = vector.load %arg3[%c0_3, %c0_4] : memref<1x16xf32, #tpu.memory_space<vmem>>, vector<1x16xf32>
    %4 = vector.broadcast %3 : vector<1x16xf32> to vector<8x16xf32>
    %5 = arith.addf %2, %4 : vector<8x16xf32>
    %c0_5 = arith.constant 0 : index
    %c0_6 = arith.constant 0 : index
    %6 = vector.load %arg4[%c0_5, %c0_6] : memref<8x16xf32, #tpu.memory_space<vmem>>, vector<8x16xf32>
    tpu.vector_store %arg4[%c0_5, %c0_6], %5 {strides = array<i32>} : memref<8x16xf32, #tpu.memory_space<vmem>>, vector<8x16xf32>,
    %cst_7 = arith.constant 5.000000e-01 : f32
    %7 = vector.broadcast %cst_7 : f32 to vector<8x16xf32>
    %8 = arith.mulf %7, %5 : vector<8x16xf32>
    %9 = math.tanh %8 : vector<8x16xf32>
    %cst_8 = arith.constant 1.000000e+00 : f32
    %10 = vector.broadcast %cst_8 : f32 to vector<8x16xf32>
    %11 = arith.addf %9, %10 : vector<8x16xf32>
    %cst_9 = arith.constant 5.000000e-01 : f32
    %12 = vector.broadcast %cst_9 : f32 to vector<8x16xf32>
    %13 = arith.mulf %12, %11 : vector<8x16xf32>
    %c0_10 = arith.constant 0 : index
    %c0_11 = arith.constant 0 : index
    %14 = vector.load %arg5[%c0_10, %c0_11] : memref<8x16xf32, #tpu.memory_space<vmem>>, vector<8x16xf32>
    tpu.vector_store %arg5[%c0_10, %c0_11], %13 {strides = array<i32>} : memref<8x16xf32, #tpu.memory_space<vmem>>, vector<8x16xf32>,
    return
  }
  func.func @transform_0(%arg0: i32) -> (i32, i32) {
    %c0_i32 = arith.constant 0 : i32
    %c0_i32_0 = arith.constant 0 : i32
    return %arg0, %c0_i32 : i32, i32
  }
  func.func @transform_1(%arg0: i32) -> (i32, i32) {
    %c0_i32 = arith.constant 0 : i32
    %c0_i32_0 = arith.constant 0 : i32
    %c0_i32_1 = arith.constant 0 : i32
    return %c0_i32, %c0_i32_0 : i32, i32
  }
  func.func @transform_2(%arg0: i32) -> (i32, i32) {
    %c0_i32 = arith.constant 0 : i32
    %c0_i32_0 = arith.constant 0 : i32
    %c0_i32_1 = arith.constant 0 : i32
    return %c0_i32, %c0_i32_0 : i32, i32
  }
  func.func @transform_3(%arg0: i32) -> (i32, i32) {
    %c0_i32 = arith.constant 0 : i32
    %c0_i32_0 = arith.constant 0 : i32
    return %arg0, %c0_i32 : i32, i32
  }
  func.func @transform_4(%arg0: i32) -> (i32, i32) {
    %c0_i32 = arith.constant 0 : i32
    %c0_i32_0 = arith.constant 0 : i32
    return %arg0, %c0_i32 : i32, i32
  }
}

</mosaic_0001>

<llo_original>
// kernel: tpu_custom_call.1
$region0: #{tpu_custom_call.1}
  #allocation0 [shape = 'u32[]', space=smem, size = 0x4, offset = 0x4, fixed_abs, tag = 'smem constant byte address 0x4 - core index']
  #allocation1 [shape = 'u32[72,128]{1,0:T(1,128)}', space=vmem, size = 0x9000, scoped, tag = 'internal scratch']
  %s0 = inlined_call_operand.vmem [shape: f32[8,32], index: 0, kind: input, shape index: {}]
  %s1 = inlined_call_operand.vmem [shape: f32[32,16], index: 1, kind: input, shape index: {}]
  %s2 = inlined_call_operand.vmem [shape: f32[1,16], index: 2, kind: input, shape index: {}]
  %s3 = inlined_call_operand.hbm [shape: f32[8,16], index: 3, kind: output, shape index: {0}]
  %s4 = inlined_call_operand.hbm [shape: f32[8,16], index: 4, kind: output, shape index: {1}]
  %5 = xla_tuple %s3, %s4
  %s6 = sld [smem:[#allocation0]]
  $region30: #{tpu_custom_call.1} parent=0
    _
  %s8 = ssub.s32 1, %s6
  %s9 = scalar_select 0, %s8, %s6
  $region1: #{tpu_custom_call.1} parent=0
    #allocation2 [shape = 'u8[4096]{0}', space=vmem, size = 0x1000, scoped, tag = 'output window, operand 0, single buffered']
    #allocation3 [shape = 's32[1]{0}', space=sflag, size = 0x4, scoped, tag = 'scoped memory for tpu_custom_call.1']
    #allocation4 [shape = 'u8[4096]{0}', space=vmem, size = 0x1000, scoped, tag = 'output window, operand 1, single buffered']
    #allocation5 [shape = 's32[1]{0}', space=sflag, size = 0x4, scoped, tag = 'scoped memory for tpu_custom_call.1']
    %10 = vsyncpa [#allocation3], 0
    %11 = vsyncpa [#allocation5], 0
    // Predicated region
    $region2: #{tpu_custom_call.1} parent=1 // pred_check
      _
    $region3: #{tpu_custom_call.1} parent=1 // pred_check_branch
      %13 = sbr.rel (0) target = $region5
    $region4: #{tpu_custom_call.1} parent=1 // pred_region
      _
    $region5: #{tpu_custom_call.1} parent=1 // pred_fallthru
      _
    // Predicated region
    $region6: #{tpu_custom_call.1} parent=1 // pred_check
      _
    $region7: #{tpu_custom_call.1} parent=1 // pred_check_branch
      %15 = sbr.rel (0) target = $region9
    $region8: #{tpu_custom_call.1} parent=1 // pred_region
      _
    $region9: #{tpu_custom_call.1} parent=1 // pred_fallthru
      _
    // Predicated region
    $region10: #{tpu_custom_call.1} parent=1 // pred_check
      _
    $region11: #{tpu_custom_call.1} parent=1 // pred_check_branch
      %17 = sbr.rel (0) target = $region13
    $region12: #{tpu_custom_call.1} parent=1 // pred_region
      _
    $region13: #{tpu_custom_call.1} parent=1 // pred_fallthru
      _
    %v18 = vld [vmem:[%s0] sm:$0xff]
    %v19 = vld [vmem:[%s1] sm:$0xff]
    %v20 = vld [vmem:[%s1 + $0x8] sm:$0xff]
    %v21 = vld [vmem:[%s1 + $0x10] sm:$0xff]
    %v22 = vld [vmem:[%s1 + $0x18] sm:$0xff]
    %v23 = vld [vmem:[%s2] sm:$0x1]
    %v25 = vperm.slane %v23, 0
    %vm27 = vcmask 261120
    %v29 = vsel %vm27, %v18, 0
    %31 = vmatpush.msra.mxu0 0.0
    %32 = vmatpush.msra.mxu0 0.0
    %33 = vmatpush.msra.mxu0 0.0
    %34 = vmatpush.msra.mxu0 0.0
    %35 = vmatpush.msra.mxu0 0.0
    %36 = vmatpush.msra.mxu0 0.0
    %37 = vmatpush.msra.mxu0 0.0
    %38 = vmatpush.msra.mxu0 0.0
    %39 = vmatpush.msra.mxu0 0.0
    %40 = vmatpush.msra.mxu0 0.0
    %41 = vmatpush.msra.mxu0 0.0
    %42 = vmatpush.msra.mxu0 0.0
    %43 = vmatpush.msra.mxu0 %v22
    %44 = vmatpush.msra.mxu0 %v21
    %45 = vmatpush.msra.mxu0 %v20
    %46 = vmatpush.msra.mxu0 %v19
    %47 = vmatmul.f32.gmra.mxu0 %v29
    %v48 = vpop.f32.mrf.mxu0
    %v49 = vadd.f32 %v25, %v48
    %50 = vdwg.mxu0
    %vm51 = vcmask 130048
    %52 = vst.msk [vmem:[#allocation2] sm:$0xff] %vm51, %v49
    %v53 = vmul.f32 %v49, 0.5
    %v54 = vtanh.pop %v53
    %v55 = vadd.f32 %v54, 1.0
    %v56 = vmul.f32 %v55, 0.5
    %57 = vst.msk [vmem:[#allocation4] sm:$0xff] %vm51, %v56
    // Predicated region
    $region14: #{tpu_custom_call.1} parent=1 // pred_check
      _
    $region15: #{tpu_custom_call.1} parent=1 // pred_check_branch
      %59 = sbr.rel (0) target = $region17
    $region16: #{tpu_custom_call.1} parent=1 // pred_region
      %61 = vsyncadd [#allocation3], 0
      %s63 = sshll.u32 [#allocation2], 4
      %s64 = int_to_ptr.vmem [resolvable:$true] %s63
      %s65 = sshll.u32 %s3, 4
      %s66 = int_to_ptr.hbm [resolvable:$true] %s65
      %68 = dma.vmem_to_hbm [thread:$0]  %s64, 128, %s66, [#allocation3]
    $region17: #{tpu_custom_call.1} parent=1 // pred_fallthru
      _
    // Predicated region
    $region18: #{tpu_custom_call.1} parent=1 // pred_check
      _
    $region19: #{tpu_custom_call.1} parent=1 // pred_check_branch
      %70 = sbr.rel (0) target = $region21
    $region20: #{tpu_custom_call.1} parent=1 // pred_region
      %72 = vsyncadd [#allocation5], 0
      %s74 = sshll.u32 [#allocation4], 4
      %s75 = int_to_ptr.vmem [resolvable:$true] %s74
      %s76 = sshll.u32 %s4, 4
      %s77 = int_to_ptr.hbm [resolvable:$true] %s76
      %79 = dma.vmem_to_hbm [thread:$0]  %s75, 128, %s77, [#allocation5]
    $region21: #{tpu_custom_call.1} parent=1 // pred_fallthru
      _
    // Predicated region
    $region22: #{tpu_custom_call.1} parent=1 // pred_check
      _
    $region23: #{tpu_custom_call.1} parent=1 // pred_check_branch
      %81 = sbr.rel (0) target = $region25
    $region24: #{tpu_custom_call.1} parent=1 // pred_region
      %83 = dma.done [#allocation3], 128
    $region25: #{tpu_custom_call.1} parent=1 // pred_fallthru
      _
    // Predicated region
    $region26: #{tpu_custom_call.1} parent=1 // pred_check
      _
    $region27: #{tpu_custom_call.1} parent=1 // pred_check_branch
      %85 = sbr.rel (0) target = $region29
    $region28: #{tpu_custom_call.1} parent=1 // pred_region
      %87 = dma.done [#allocation5], 128
    $region29: #{tpu_custom_call.1} parent=1 // pred_fallthru
      _
    %88 = vsyncpa [#allocation3], 1
    %89 = vsyncpa [#allocation5], 1

</llo_original>
